<compile_context>
chip_gen: v7x
topology: tpu7x:2x2x1
jax: 0.10.0
libtpu: 0.0.40
codegen_flags: <defaults>
</compile_context>

<pallas_src>
import math

import jax
import jax.numpy as jnp
from jax.experimental import pallas as pl
from jax.experimental.pallas import tpu as pltpu


_SMALL_BYTES = 256 * 1024          # below this, plain-JAX broadcast add wins
_MIN_GRID_STEPS = 4                # >= 2 * (2 TensorCores on v7x)
_SPLIT_THRESHOLD = 4 * 1024 * 1024 # only force multi-step grids above this

_CHIP_PARAMS = None                # (target_block_bytes, vmem_limit_bytes)


def _chip_params():
    """Generation-aware block-size target and VMEM limit."""
    global _CHIP_PARAMS
    if _CHIP_PARAMS is None:
        try:
            vmem = pltpu.get_tpu_info().vmem_capacity_bytes
        except Exception:
            vmem = 64 * 1024 * 1024            # conservative (v7x-sized)
        if vmem >= 100 * 1024 * 1024:          # v5e / v6e: 128 MiB VMEM
            _CHIP_PARAMS = (8 * 1024 * 1024, 48 * 1024 * 1024)
        else:                                  # v7x: 64 MiB VMEM per TC
            _CHIP_PARAMS = (6 * 1024 * 1024, 32 * 1024 * 1024)
    return _CHIP_PARAMS


# ------------------------------------------------------------------- kernel --
def _addbias_kernel(x_ref, b_ref, o_ref):
    # In-kernel dtype cast (no wrapper-side HBM upcast); bias block broadcasts
    # against the x tile on the VPU.
    o_ref[...] = x_ref[...].astype(o_ref.dtype) + b_ref[...]


# --------------------------------------------------------------- core caller --
def _pallas_add_2d(x, bias_row, out_dtype):
    """out[r, c] = x[r, c] + bias_row[0, c], tiled over rows (and lanes if wide)."""
    R, C = x.shape
    target, limit = _chip_params()
    x_isz = x.dtype.itemsize
    o_isz = jnp.dtype(out_dtype).itemsize

    # Lane tile: full width unless a single row's in+out traffic exceeds the
    # target block size; partial lane tiles are multiples of 512 (=> unmasked).
    if C * (x_isz + o_isz) > target:
        tc = ((target // (x_isz + o_isz)) // 512) * 512
        tc = max(512, min(tc, C))
    else:
        tc = C

    # Row tile: ~target bytes of in+out per block, dtype-aware sublane align.
    row_align = max(8, 32 // min(x_isz, o_isz))
    bytes_per_row = tc * (x_isz + o_isz)
    tb = max(1, target // bytes_per_row)
    # Keep both v7x TensorCores busy for non-tiny inputs.
    if R * C * x_isz > _SPLIT_THRESHOLD:
        tb = min(tb, pl.cdiv(R, _MIN_GRID_STEPS))
    if tb < R:
        tb = max(row_align, (tb // row_align) * row_align)
    tb = min(tb, R)

    grid = (pl.cdiv(R, tb), pl.cdiv(C, tc))
    return pl.pallas_call(
        _addbias_kernel,
        out_shape=jax.ShapeDtypeStruct((R, C), out_dtype),
        grid_spec=pltpu.PrefetchScalarGridSpec(
            num_scalar_prefetch=0,
            grid=grid,
            in_specs=[
                pl.BlockSpec((tb, tc), lambda i, j: (i, j)),
                pl.BlockSpec((1, tc), lambda i, j: (0, j)),   # bias: resident per lane tile
            ],
            out_specs=pl.BlockSpec((tb, tc), lambda i, j: (i, j)),
        ),
        compiler_params=pltpu.CompilerParams(
            dimension_semantics=("parallel", "parallel"),
            vmem_limit_bytes=limit,
        ),
    )(x, bias_row)


# ------------------------------------------------------------------ wrapper --
def add_bias(x, bias_param):
    """AddBias.forward. bias_param has the PyTorch parameter shape (F, 1)."""
    out_dtype = jnp.result_type(x.dtype, bias_param.dtype)
    bias_vec = bias_param.reshape(-1).astype(out_dtype)      # == bias.t().view(-1)
    F = bias_vec.shape[0]
    small = x.size * x.dtype.itemsize <= _SMALL_BYTES

    if x.ndim == 2:
        B, _ = x.shape
        if small:
            # Tiny RL-policy shapes: pallas dispatch overhead dominates; let XLA fuse.
            return x.astype(out_dtype) + bias_vec.reshape(1, F)
        if F >= 128:
            # Already lane-dense: tile rows (and lanes if very wide).
            return _pallas_add_2d(x, bias_vec.reshape(1, F), out_dtype)
        # Narrow F: fold g rows onto the lane axis with a FREE contiguous
        # reshape (B, F) -> (B//g, g*F); g*F is a multiple of 128 (unmasked vst).
        base_g = 128 // math.gcd(F, 128)
        g = base_g * max(1, 512 // (base_g * F))
        main = (B // g) * g
        if main == 0:
            return x.astype(out_dtype) + bias_vec.reshape(1, F)
        bias_tiled = jnp.tile(bias_vec, g).reshape(1, g * F)  # few KB, VMEM-resident
        if main == B:
            out = _pallas_add_2d(x.reshape(B // g, g * F), bias_tiled, out_dtype)
            return out.reshape(B, F)
        # Ragged batch: bulk via Pallas, tiny (< g rows) tail via plain JAX.
        out_main = _pallas_add_2d(
            x[:main].reshape(main // g, g * F), bias_tiled, out_dtype
        ).reshape(main, F)
        out_tail = x[main:].astype(out_dtype) + bias_vec.reshape(1, F)
        return jnp.concatenate([out_main, out_tail], axis=0)

    elif x.ndim == 4:
        N, C, H, W = x.shape
        if small:
            return x.astype(out_dtype) + bias_vec.reshape(1, C, 1, 1)
        # Fold C*H*W onto the lane axis (free reshape); bias repeated H*W times
        # per channel stays small and resident, and C < 8 no longer wastes sublanes.
        x2 = x.reshape(N, C * H * W)
        bias_row = jnp.repeat(bias_vec, H * W).reshape(1, C * H * W)
        out2 = _pallas_add_2d(x2, bias_row, out_dtype)
        return out2.reshape(N, C, H, W)

    else:
        raise ValueError(f"AddBias expects 2D or 4D input, got {x.ndim}D")


if __name__ == "__main__":
    key = jax.random.PRNGKey(0)
    keys = jax.random.split(key, 8)

    # --- Tiny shapes implied by the RL policy module (plain-JAX fast path) ---
    F = 4
    bias_param = jax.random.normal(keys[0], (F, 1), dtype=jnp.float32)

    x2_tiny = jax.random.normal(keys[1], (2, F), dtype=jnp.float32)
    out = jax.block_until_ready(add_bias(x2_tiny, bias_param))
    ref = x2_tiny + bias_param.reshape(1, -1)
    assert out.shape == ref.shape and out.dtype == ref.dtype
    assert jnp.allclose(out, ref, atol=1e-6, rtol=1e-6)

    x4_tiny = jax.random.normal(keys[2], (2, F, 16, 16), dtype=jnp.float32)
    out = jax.block_until_ready(add_bias(x4_tiny, bias_param))
    ref = x4_tiny + bias_param.reshape(1, -1, 1, 1)
    assert out.shape == ref.shape and out.dtype == ref.dtype
    assert jnp.allclose(out, ref, atol=1e-6, rtol=1e-6)

    # --- Pallas paths ---
    # (a) narrow-F 2D, batch divisible by the fold factor (pure reshape path).
    x2_big = jax.random.normal(keys[3], (32768, F), dtype=jnp.float32)
    out = jax.block_until_ready(add_bias(x2_big, bias_param))
    ref = x2_big + bias_param.reshape(1, -1)
    assert out.shape == ref.shape and out.dtype == ref.dtype
    assert jnp.allclose(out, ref, atol=1e-6, rtol=1e-6)

    # (b) narrow-F 2D with a ragged batch (bulk Pallas + tiny JAX tail).
    x2_rag = jax.random.normal(keys[4], (30000, F), dtype=jnp.float32)
    out = jax.block_until_ready(add_bias(x2_rag, bias_param))
    ref = x2_rag + bias_param.reshape(1, -1)
    assert out.shape == ref.shape and out.dtype == ref.dtype
    assert jnp.allclose(out, ref, atol=1e-6, rtol=1e-6)

    # (c) wide-F 2D with mixed dtypes (bf16 activations + f32 bias, in-kernel cast).
    F2 = 256
    bias_param2 = jax.random.normal(keys[5], (F2, 1), dtype=jnp.float32)
    x2_wide = jax.random.normal(keys[6], (2048, F2), dtype=jnp.bfloat16)
    out = jax.block_until_ready(add_bias(x2_wide, bias_param2))
    ref = x2_wide.astype(jnp.float32) + bias_param2.reshape(1, -1)
    assert out.shape == ref.shape and out.dtype == jnp.float32
    assert jnp.allclose(out, ref, atol=1e-6, rtol=1e-6)

    # (d) 4D NCHW large enough for the Pallas path (channels folded onto lanes).
    C4 = 8
    bias_param4 = jax.random.normal(keys[7], (C4, 1), dtype=jnp.float32)
    x4_big = jax.random.normal(keys[0], (8, C4, 64, 64), dtype=jnp.float32)
    out = jax.block_until_ready(add_bias(x4_big, bias_param4))
    ref = x4_big + bias_param4.reshape(1, -1, 1, 1)
    assert out.shape == ref.shape and out.dtype == ref.dtype
    assert jnp.allclose(out, ref, atol=1e-6, rtol=1e-6)

    print("KERNEL_OK")
</pallas_src>

<mosaic_0001>
module attributes {stable_mosaic.version = 11 : i64} {
  func.func @_addbias_kernel(%arg0: i32, %arg1: i32, %arg2: memref<256x512xf32, #tpu.memory_space<vmem>>, %arg3: memref<1x512xf32, #tpu.memory_space<vmem>>, %arg4: memref<256x512xf32, #tpu.memory_space<vmem>>) attributes {dimension_semantics = [#tpu.dimension_semantics<parallel>, #tpu.dimension_semantics<parallel>], iteration_bounds = array<i64: 1, 1>, scalar_prefetch = 0 : i64, scratch_operands = 0 : i64, tpu.core_type = #tpu.core_type<tc>, window_params = [{transform_indices = @transform_0, window_bounds = array<i64: 256, 512>}, {transform_indices = @transform_1, window_bounds = array<i64: 1, 512>}, {transform_indices = @transform_2, window_bounds = array<i64: 256, 512>}]} {
    %c0 = arith.constant 0 : index
    %c0_0 = arith.constant 0 : index
    %0 = vector.load %arg2[%c0, %c0_0] : memref<256x512xf32, #tpu.memory_space<vmem>>, vector<256x512xf32>
    %c0_1 = arith.constant 0 : index
    %c0_2 = arith.constant 0 : index
    %1 = vector.load %arg3[%c0_1, %c0_2] : memref<1x512xf32, #tpu.memory_space<vmem>>, vector<1x512xf32>
    %2 = vector.broadcast %1 : vector<1x512xf32> to vector<256x512xf32>
    %3 = arith.addf %0, %2 : vector<256x512xf32>
    %c0_3 = arith.constant 0 : index
    %c0_4 = arith.constant 0 : index
    %4 = vector.load %arg4[%c0_3, %c0_4] : memref<256x512xf32, #tpu.memory_space<vmem>>, vector<256x512xf32>
    tpu.vector_store %arg4[%c0_3, %c0_4], %3 {strides = array<i32>} : memref<256x512xf32, #tpu.memory_space<vmem>>, vector<256x512xf32>,
    return
  }
  func.func @transform_0(%arg0: i32, %arg1: i32) -> (i32, i32) {
    %c0_i32 = arith.constant 0 : i32
    return %arg0, %arg1 : i32, i32
  }
  func.func @transform_1(%arg0: i32, %arg1: i32) -> (i32, i32) {
    %c0_i32 = arith.constant 0 : i32
    %c0_i32_0 = arith.constant 0 : i32
    return %c0_i32, %arg1 : i32, i32
  }
  func.func @transform_2(%arg0: i32, %arg1: i32) -> (i32, i32) {
    %c0_i32 = arith.constant 0 : i32
    return %arg0, %arg1 : i32, i32
  }
}

</mosaic_0001>

<llo_original>
// kernel: tpu_custom_call.1
$region0: #{tpu_custom_call.1}
  #allocation0 [shape = 'u32[]', space=smem, size = 0x4, offset = 0x4, fixed_abs, tag = 'smem constant byte address 0x4 - core index']
  #allocation1 [shape = 'u32[144,128]{1,0:T(1,128)}', space=vmem, size = 0x12000, scoped, tag = 'internal scratch']
  %s0 = inlined_call_operand.hbm [shape: f32[256,512], index: 0, kind: input, shape index: {}]
  %s1 = inlined_call_operand.hbm [shape: f32[1,512], index: 1, kind: input, shape index: {}]
  %s2 = inlined_call_operand.hbm [shape: f32[256,512], index: 2, kind: output, shape index: {}]
  %s3 = sld [smem:[#allocation0]]
  $region26: #{tpu_custom_call.1} parent=0
    _
  %s5 = ssub.s32 1, %s3
  %s6 = scalar_select 0, %s5, %s3
  $region1: #{tpu_custom_call.1} parent=0
    #allocation2 [shape = 'u8[524288]{0}', space=vmem, size = 0x80000, scoped, tag = 'input window, operand 0, single buffered']
    #allocation3 [shape = 's32[1]{0}', space=sflag, size = 0x4, scoped, tag = 'scoped memory for tpu_custom_call.1']
    #allocation4 [shape = 's32[1]{0}', space=sflag, size = 0x4, scoped, tag = 'scoped memory for tpu_custom_call.1']
    #allocation5 [shape = 'u8[2048]{0}', space=vmem, size = 0x800, scoped, tag = 'input window, operand 1, single buffered']
    #allocation6 [shape = 's32[1]{0}', space=sflag, size = 0x4, scoped, tag = 'scoped memory for tpu_custom_call.1']
    #allocation7 [shape = 'u8[524288]{0}', space=vmem, size = 0x80000, scoped, tag = 'output window, operand 0, single buffered']
    %7 = vsyncpa [#allocation3], 0
    %8 = vsyncpa [#allocation6], 0
    %9 = vsyncpa [#allocation4], 0
    // Predicated region
    $region2: #{tpu_custom_call.1} parent=1 // pred_check
      _
    $region3: #{tpu_custom_call.1} parent=1 // pred_check_branch
      %11 = sbr.rel (0) target = $region5
    $region4: #{tpu_custom_call.1} parent=1 // pred_region
      %s13 = ssub.s32 16384, 16384
      %14 = vsyncadd [#allocation3], %s13
      %s15 = sshll.u32 [#allocation2], 4
      %s16 = int_to_ptr.vmem [resolvable:$true] %s15
      %21 = dma.hbm_to_vmem [thread:$0]  %s0, 16384, %s16, [#allocation3], 512, 512, 32
    $region5: #{tpu_custom_call.1} parent=1 // pred_fallthru
      _
    // Predicated region
    $region6: #{tpu_custom_call.1} parent=1 // pred_check
      _
    $region7: #{tpu_custom_call.1} parent=1 // pred_check_branch
      %23 = sbr.rel (0) target = $region9
    $region8: #{tpu_custom_call.1} parent=1 // pred_region
      %s25 = ssub.s32 64, 64
      %26 = vsyncadd [#allocation6], %s25
      %s28 = sshll.u32 [#allocation5], 4
      %s29 = int_to_ptr.vmem [resolvable:$true] %s28
      %31 = dma.hbm_to_vmem [thread:$0]  %s1, 64, %s29, [#allocation6]
    $region9: #{tpu_custom_call.1} parent=1 // pred_fallthru
      _
    // Predicated region
    $region10: #{tpu_custom_call.1} parent=1 // pred_check
      _
    $region11: #{tpu_custom_call.1} parent=1 // pred_check_branch
      %33 = sbr.rel (0) target = $region13
    $region12: #{tpu_custom_call.1} parent=1 // pred_region
      %34 = dma.done [#allocation3], 16384
    $region13: #{tpu_custom_call.1} parent=1 // pred_fallthru
      _
    // Predicated region
    $region14: #{tpu_custom_call.1} parent=1 // pred_check
      _
    $region15: #{tpu_custom_call.1} parent=1 // pred_check_branch
      %36 = sbr.rel (0) target = $region17
    $region16: #{tpu_custom_call.1} parent=1 // pred_region
      %37 = dma.done [#allocation6], 64
    $region17: #{tpu_custom_call.1} parent=1 // pred_fallthru
      _
    %v38 = vld [vmem:[#allocation2] sm:$0xff]
    %v39 = vld [vmem:[#allocation2 + $0x8] sm:$0xff]
    %v40 = vld [vmem:[#allocation2 + $0x10] sm:$0xff]
    %v41 = vld [vmem:[#allocation2 + $0x18] sm:$0xff]
    %v42 = vld [vmem:[#allocation2 + $0x20] sm:$0xff]
    %v43 = vld [vmem:[#allocation2 + $0x28] sm:$0xff]
    %v44 = vld [vmem:[#allocation2 + $0x30] sm:$0xff]
    %v45 = vld [vmem:[#allocation2 + $0x38] sm:$0xff]
    %v46 = vld [vmem:[#allocation2 + $0x40] sm:$0xff]
    %v47 = vld [vmem:[#allocation2 + $0x48] sm:$0xff]
    %v48 = vld [vmem:[#allocation2 + $0x50] sm:$0xff]
    %v49 = vld [vmem:[#allocation2 + $0x58] sm:$0xff]
    %v50 = vld [vmem:[#allocation2 + $0x60] sm:$0xff]
    %v51 = vld [vmem:[#allocation2 + $0x68] sm:$0xff]
    %v52 = vld [vmem:[#allocation2 + $0x70] sm:$0xff]
    %v53 = vld [vmem:[#allocation2 + $0x78] sm:$0xff]
    %v54 = vld [vmem:[#allocation2 + $0x80] sm:$0xff]
    %v55 = vld [vmem:[#allocation2 + $0x88] sm:$0xff]
    %v56 = vld [vmem:[#allocation2 + $0x90] sm:$0xff]
    %v57 = vld [vmem:[#allocation2 + $0x98] sm:$0xff]
    %v58 = vld [vmem:[#allocation2 + $0xa0] sm:$0xff]
    %v59 = vld [vmem:[#allocation2 + $0xa8] sm:$0xff]
    %v60 = vld [vmem:[#allocation2 + $0xb0] sm:$0xff]
    %v61 = vld [vmem:[#allocation2 + $0xb8] sm:$0xff]
    %v62 = vld [vmem:[#allocation2 + $0xc0] sm:$0xff]
    %v63 = vld [vmem:[#allocation2 + $0xc8] sm:$0xff]
    %v64 = vld [vmem:[#allocation2 + $0xd0] sm:$0xff]
    %v65 = vld [vmem:[#allocation2 + $0xd8] sm:$0xff]
    %v66 = vld [vmem:[#allocation2 + $0xe0] sm:$0xff]
    %v67 = vld [vmem:[#allocation2 + $0xe8] sm:$0xff]
    %v68 = vld [vmem:[#allocation2 + $0xf0] sm:$0xff]
    %v69 = vld [vmem:[#allocation2 + $0xf8] sm:$0xff]
    %v70 = vld [vmem:[#allocation2 + $0x100] sm:$0xff]
    %v71 = vld [vmem:[#allocation2 + $0x108] sm:$0xff]
    %v72 = vld [vmem:[#allocation2 + $0x110] sm:$0xff]
    %v73 = vld [vmem:[#allocation2 + $0x118] sm:$0xff]
    %v74 = vld [vmem:[#allocation2 + $0x120] sm:$0xff]
    %v75 = vld [vmem:[#allocation2 + $0x128] sm:$0xff]
    %v76 = vld [vmem:[#allocation2 + $0x130] sm:$0xff]
    %v77 = vld [vmem:[#allocation2 + $0x138] sm:$0xff]
    %v78 = vld [vmem:[#allocation2 + $0x140] sm:$0xff]
    %v79 = vld [vmem:[#allocation2 + $0x148] sm:$0xff]
    %v80 = vld [vmem:[#allocation2 + $0x150] sm:$0xff]
    %v81 = vld [vmem:[#allocation2 + $0x158] sm:$0xff]
    %v82 = vld [vmem:[#allocation2 + $0x160] sm:$0xff]
    %v83 = vld [vmem:[#allocation2 + $0x168] sm:$0xff]
    %v84 = vld [vmem:[#allocation2 + $0x170] sm:$0xff]
    %v85 = vld [vmem:[#allocation2 + $0x178] sm:$0xff]
    %v86 = vld [vmem:[#allocation2 + $0x180] sm:$0xff]
    %v87 = vld [vmem:[#allocation2 + $0x188] sm:$0xff]
    %v88 = vld [vmem:[#allocation2 + $0x190] sm:$0xff]
    %v89 = vld [vmem:[#allocation2 + $0x198] sm:$0xff]
    %v90 = vld [vmem:[#allocation2 + $0x1a0] sm:$0xff]
    %v91 = vld [vmem:[#allocation2 + $0x1a8] sm:$0xff]
    %v92 = vld [vmem:[#allocation2 + $0x1b0] sm:$0xff]
    %v93 = vld [vmem:[#allocation2 + $0x1b8] sm:$0xff]
    %v94 = vld [vmem:[#allocation2 + $0x1c0] sm:$0xff]
    %v95 = vld [vmem:[#allocation2 + $0x1c8] sm:$0xff]
    %v96 = vld [vmem:[#allocation2 + $0x1d0] sm:$0xff]
    %v97 = vld [vmem:[#allocation2 + $0x1d8] sm:$0xff]
    %v98 = vld [vmem:[#allocation2 + $0x1e0] sm:$0xff]
    %v99 = vld [vmem:[#allocation2 + $0x1e8] sm:$0xff]
    %v100 = vld [vmem:[#allocation2 + $0x1f0] sm:$0xff]
    %v101 = vld [vmem:[#allocation2 + $0x1f8] sm:$0xff]
    %v102 = vld [vmem:[#allocation2 + $0x200] sm:$0xff]
    %v103 = vld [vmem:[#allocation2 + $0x208] sm:$0xff]
    %v104 = vld [vmem:[#allocation2 + $0x210] sm:$0xff]
    %v105 = vld [vmem:[#allocation2 + $0x218] sm:$0xff]
    %v106 = vld [vmem:[#allocation2 + $0x220] sm:$0xff]
    %v107 = vld [vmem:[#allocation2 + $0x228] sm:$0xff]
    %v108 = vld [vmem:[#allocation2 + $0x230] sm:$0xff]
    %v109 = vld [vmem:[#allocation2 + $0x238] sm:$0xff]
    %v110 = vld [vmem:[#allocation2 + $0x240] sm:$0xff]
    %v111 = vld [vmem:[#allocation2 + $0x248] sm:$0xff]
    %v112 = vld [vmem:[#allocation2 + $0x250] sm:$0xff]
    %v113 = vld [vmem:[#allocation2 + $0x258] sm:$0xff]
    %v114 = vld [vmem:[#allocation2 + $0x260] sm:$0xff]
    %v115 = vld [vmem:[#allocation2 + $0x268] sm:$0xff]
    %v116 = vld [vmem:[#allocation2 + $0x270] sm:$0xff]
    %v117 = vld [vmem:[#allocation2 + $0x278] sm:$0xff]
    %v118 = vld [vmem:[#allocation2 + $0x280] sm:$0xff]
    %v119 = vld [vmem:[#allocation2 + $0x288] sm:$0xff]
    %v120 = vld [vmem:[#allocation2 + $0x290] sm:$0xff]
    %v121 = vld [vmem:[#allocation2 + $0x298] sm:$0xff]
    %v122 = vld [vmem:[#allocation2 + $0x2a0] sm:$0xff]
    %v123 = vld [vmem:[#allocation2 + $0x2a8] sm:$0xff]
    %v124 = vld [vmem:[#allocation2 + $0x2b0] sm:$0xff]
    %v125 = vld [vmem:[#allocation2 + $0x2b8] sm:$0xff]
    %v126 = vld [vmem:[#allocation2 + $0x2c0] sm:$0xff]
    %v127 = vld [vmem:[#allocation2 + $0x2c8] sm:$0xff]
    %v128 = vld [vmem:[#allocation2 + $0x2d0] sm:$0xff]
    %v129 = vld [vmem:[#allocation2 + $0x2d8] sm:$0xff]
    %v130 = vld [vmem:[#allocation2 + $0x2e0] sm:$0xff]
    %v131 = vld [vmem:[#allocation2 + $0x2e8] sm:$0xff]
    %v132 = vld [vmem:[#allocation2 + $0x2f0] sm:$0xff]
    %v133 = vld [vmem:[#allocation2 + $0x2f8] sm:$0xff]
    %v134 = vld [vmem:[#allocation2 + $0x300] sm:$0xff]
    %v135 = vld [vmem:[#allocation2 + $0x308] sm:$0xff]
    %v136 = vld [vmem:[#allocation2 + $0x310] sm:$0xff]
    %v137 = vld [vmem:[#allocation2 + $0x318] sm:$0xff]
    %v138 = vld [vmem:[#allocation2 + $0x320] sm:$0xff]
    %v139 = vld [vmem:[#allocation2 + $0x328] sm:$0xff]
    %v140 = vld [vmem:[#allocation2 + $0x330] sm:$0xff]
    %v141 = vld [vmem:[#allocation2 + $0x338] sm:$0xff]
    %v142 = vld [vmem:[#allocation2 + $0x340] sm:$0xff]
    %v143 = vld [vmem:[#allocation2 + $0x348] sm:$0xff]
    %v144 = vld [vmem:[#allocation2 + $0x350] sm:$0xff]
    %v145 = vld [vmem:[#allocation2 + $0x358] sm:$0xff]
    %v146 = vld [vmem:[#allocation2 + $0x360] sm:$0xff]
    %v147 = vld [vmem:[#allocation2 + $0x368] sm:$0xff]
    %v148 = vld [vmem:[#allocation2 + $0x370] sm:$0xff]
    %v149 = vld [vmem:[#allocation2 + $0x378] sm:$0xff]
    %v150 = vld [vmem:[#allocation2 + $0x380] sm:$0xff]
    %v151 = vld [vmem:[#allocation2 + $0x388] sm:$0xff]
    %v152 = vld [vmem:[#allocation2 + $0x390] sm:$0xff]
    %v153 = vld [vmem:[#allocation2 + $0x398] sm:$0xff]
    %v154 = vld [vmem:[#allocation2 + $0x3a0] sm:$0xff]
    %v155 = vld [vmem:[#allocation2 + $0x3a8] sm:$0xff]
    %v156 = vld [vmem:[#allocation2 + $0x3b0] sm:$0xff]
    %v157 = vld [vmem:[#allocation2 + $0x3b8] sm:$0xff]
    %v158 = vld [vmem:[#allocation2 + $0x3c0] sm:$0xff]
    %v159 = vld [vmem:[#allocation2 + $0x3c8] sm:$0xff]
    %v160 = vld [vmem:[#allocation2 + $0x3d0] sm:$0xff]
    %v161 = vld [vmem:[#allocation2 + $0x3d8] sm:$0xff]
    %v162 = vld [vmem:[#allocation2 + $0x3e0] sm:$0xff]
    %v163 = vld [vmem:[#allocation2 + $0x3e8] sm:$0xff]
    %v164 = vld [vmem:[#allocation2 + $0x3f0] sm:$0xff]
    %v165 = vld [vmem:[#allocation2 + $0x3f8] sm:$0xff]
    %v166 = vld [vmem:[#allocation5] sm:$0xf]
    %v168 = vlaneseq
    %v169 = vshrl.u32 %v168, 7
    %v170 = vsub.s32 0, %v169
    %v171 = vrot.slane %v166, %v170
    %v172 = vlaneseq
    %v173 = vshrl.u32 %v172, 7
    %v174 = vsub.s32 1, %v173
    %v175 = vrot.slane %v166, %v174
    %v176 = vlaneseq
    %v177 = vshrl.u32 %v176, 7
    %v178 = vsub.s32 2, %v177
    %v179 = vrot.slane %v166, %v178
    %v180 = vlaneseq
    %v181 = vshrl.u32 %v180, 7
    %v182 = vsub.s32 3, %v181
    %v183 = vrot.slane %v166, %v182
    %v188 = vadd.f32 %v38, %v171
    %v189 = vadd.f32 %v39, %v175
    %v190 = vadd.f32 %v40, %v179
    %v191 = vadd.f32 %v41, %v183
    %v192 = vadd.f32 %v42, %v171
    %v193 = vadd.f32 %v43, %v175
    %v194 = vadd.f32 %v44, %v179
    %v195 = vadd.f32 %v45, %v183
    %v196 = vadd.f32 %v46, %v171
    %v197 = vadd.f32 %v47, %v175
    %v198 = vadd.f32 %v48, %v179
    %v199 = vadd.f32 %v49, %v183
    %v200 = vadd.f32 %v50, %v171
    %v201 = vadd.f32 %v51, %v175
    %v202 = vadd.f32 %v52, %v179
    %v203 = vadd.f32 %v53, %v183
    %v204 = vadd.f32 %v54, %v171
    %v205 = vadd.f32 %v55, %v175
    %v206 = vadd.f32 %v56, %v179
    %v207 = vadd.f32 %v57, %v183
    %v208 = vadd.f32 %v58, %v171
    %v209 = vadd.f32 %v59, %v175
    %v210 = vadd.f32 %v60, %v179
    %v211 = vadd.f32 %v61, %v183
    %v212 = vadd.f32 %v62, %v171
    %v213 = vadd.f32 %v63, %v175
    %v214 = vadd.f32 %v64, %v179
    %v215 = vadd.f32 %v65, %v183
    %v216 = vadd.f32 %v66, %v171
    %v217 = vadd.f32 %v67, %v175
    %v218 = vadd.f32 %v68, %v179
    %v219 = vadd.f32 %v69, %v183
    %v220 = vadd.f32 %v70, %v171
    %v221 = vadd.f32 %v71, %v175
    %v222 = vadd.f32 %v72, %v179
    %v223 = vadd.f32 %v73, %v183
    %v224 = vadd.f32 %v74, %v171
    %v225 = vadd.f32 %v75, %v175
    %v226 = vadd.f32 %v76, %v179
    %v227 = vadd.f32 %v77, %v183
    %v228 = vadd.f32 %v78, %v171
    %v229 = vadd.f32 %v79, %v175
    %v230 = vadd.f32 %v80, %v179
    %v231 = vadd.f32 %v81, %v183
    %v232 = vadd.f32 %v82, %v171
    %v233 = vadd.f32 %v83, %v175
    %v234 = vadd.f32 %v84, %v179
    %v235 = vadd.f32 %v85, %v183
    %v236 = vadd.f32 %v86, %v171
    %v237 = vadd.f32 %v87, %v175
    %v238 = vadd.f32 %v88, %v179
    %v239 = vadd.f32 %v89, %v183
    %v240 = vadd.f32 %v90, %v171
    %v241 = vadd.f32 %v91, %v175
    %v242 = vadd.f32 %v92, %v179
    %v243 = vadd.f32 %v93, %v183
    %v244 = vadd.f32 %v94, %v171
    %v245 = vadd.f32 %v95, %v175
    %v246 = vadd.f32 %v96, %v179
    %v247 = vadd.f32 %v97, %v183
    %v248 = vadd.f32 %v98, %v171
    %v249 = vadd.f32 %v99, %v175
    %v250 = vadd.f32 %v100, %v179
    %v251 = vadd.f32 %v101, %v183
    %v252 = vadd.f32 %v102, %v171
    %v253 = vadd.f32 %v103, %v175
    %v254 = vadd.f32 %v104, %v179
    %v255 = vadd.f32 %v105, %v183
    %v256 = vadd.f32 %v106, %v171
    %v257 = vadd.f32 %v107, %v175
    %v258 = vadd.f32 %v108, %v179
    %v259 = vadd.f32 %v109, %v183
    %v260 = vadd.f32 %v110, %v171
    %v261 = vadd.f32 %v111, %v175
    %v262 = vadd.f32 %v112, %v179
    %v263 = vadd.f32 %v113, %v183
    %v264 = vadd.f32 %v114, %v171
    %v265 = vadd.f32 %v115, %v175
    %v266 = vadd.f32 %v116, %v179
    %v267 = vadd.f32 %v117, %v183
    %v268 = vadd.f32 %v118, %v171
    %v269 = vadd.f32 %v119, %v175
    %v270 = vadd.f32 %v120, %v179
    %v271 = vadd.f32 %v121, %v183
    %v272 = vadd.f32 %v122, %v171
    %v273 = vadd.f32 %v123, %v175
    %v274 = vadd.f32 %v124, %v179
    %v275 = vadd.f32 %v125, %v183
    %v276 = vadd.f32 %v126, %v171
    %v277 = vadd.f32 %v127, %v175
    %v278 = vadd.f32 %v128, %v179
    %v279 = vadd.f32 %v129, %v183
    %v280 = vadd.f32 %v130, %v171
    %v281 = vadd.f32 %v131, %v175
    %v282 = vadd.f32 %v132, %v179
    %v283 = vadd.f32 %v133, %v183
    %v284 = vadd.f32 %v134, %v171
    %v285 = vadd.f32 %v135, %v175
    %v286 = vadd.f32 %v136, %v179
    %v287 = vadd.f32 %v137, %v183
    %v288 = vadd.f32 %v138, %v171
    %v289 = vadd.f32 %v139, %v175
    %v290 = vadd.f32 %v140, %v179
    %v291 = vadd.f32 %v141, %v183
    %v292 = vadd.f32 %v142, %v171
    %v293 = vadd.f32 %v143, %v175
    %v294 = vadd.f32 %v144, %v179
    %v295 = vadd.f32 %v145, %v183
    %v296 = vadd.f32 %v146, %v171
    %v297 = vadd.f32 %v147, %v175
    %v298 = vadd.f32 %v148, %v179
    %v299 = vadd.f32 %v149, %v183
    %v300 = vadd.f32 %v150, %v171
    %v301 = vadd.f32 %v151, %v175
    %v302 = vadd.f32 %v152, %v179
    %v303 = vadd.f32 %v153, %v183
    %v304 = vadd.f32 %v154, %v171
    %v305 = vadd.f32 %v155, %v175
    %v306 = vadd.f32 %v156, %v179
    %v307 = vadd.f32 %v157, %v183
    %v308 = vadd.f32 %v158, %v171
    %v309 = vadd.f32 %v159, %v175
    %v310 = vadd.f32 %v160, %v179
    %v311 = vadd.f32 %v161, %v183
    %v312 = vadd.f32 %v162, %v171
    %v313 = vadd.f32 %v163, %v175
    %v314 = vadd.f32 %v164, %v179
    %v315 = vadd.f32 %v165, %v183
    %316 = vst [vmem:[#allocation7] sm:$0xff] %v188
    %317 = vst [vmem:[#allocation7 + $0x8] sm:$0xff] %v189
    %318 = vst [vmem:[#allocation7 + $0x10] sm:$0xff] %v190
    %319 = vst [vmem:[#allocation7 + $0x18] sm:$0xff] %v191
    %320 = vst [vmem:[#allocation7 + $0x20] sm:$0xff] %v192
    %321 = vst [vmem:[#allocation7 + $0x28] sm:$0xff] %v193
    %322 = vst [vmem:[#allocation7 + $0x30] sm:$0xff] %v194
    %323 = vst [vmem:[#allocation7 + $0x38] sm:$0xff] %v195
    %324 = vst [vmem:[#allocation7 + $0x40] sm:$0xff] %v196
    %325 = vst [vmem:[#allocation7 + $0x48] sm:$0xff] %v197
    %326 = vst [vmem:[#allocation7 + $0x50] sm:$0xff] %v198
    %327 = vst [vmem:[#allocation7 + $0x58] sm:$0xff] %v199
    %328 = vst [vmem:[#allocation7 + $0x60] sm:$0xff] %v200
    %329 = vst [vmem:[#allocation7 + $0x68] sm:$0xff] %v201
    %330 = vst [vmem:[#allocation7 + $0x70] sm:$0xff] %v202
    %331 = vst [vmem:[#allocation7 + $0x78] sm:$0xff] %v203
    %332 = vst [vmem:[#allocation7 + $0x80] sm:$0xff] %v204
    %333 = vst [vmem:[#allocation7 + $0x88] sm:$0xff] %v205
    %334 = vst [vmem:[#allocation7 + $0x90] sm:$0xff] %v206
    %335 = vst [vmem:[#allocation7 + $0x98] sm:$0xff] %v207
    %336 = vst [vmem:[#allocation7 + $0xa0] sm:$0xff] %v208
    %337 = vst [vmem:[#allocation7 + $0xa8] sm:$0xff] %v209
    %338 = vst [vmem:[#allocation7 + $0xb0] sm:$0xff] %v210
    %339 = vst [vmem:[#allocation7 + $0xb8] sm:$0xff] %v211
    %340 = vst [vmem:[#allocation7 + $0xc0] sm:$0xff] %v212
    %341 = vst [vmem:[#allocation7 + $0xc8] sm:$0xff] %v213
    %342 = vst [vmem:[#allocation7 + $0xd0] sm:$0xff] %v214
    %343 = vst [vmem:[#allocation7 + $0xd8] sm:$0xff] %v215
    %344 = vst [vmem:[#allocation7 + $0xe0] sm:$0xff] %v216
    %345 = vst [vmem:[#allocation7 + $0xe8] sm:$0xff] %v217
    %346 = vst [vmem:[#allocation7 + $0xf0] sm:$0xff] %v218
    %347 = vst [vmem:[#allocation7 + $0xf8] sm:$0xff] %v219
    %348 = vst [vmem:[#allocation7 + $0x100] sm:$0xff] %v220
    %349 = vst [vmem:[#allocation7 + $0x108] sm:$0xff] %v221
    %350 = vst [vmem:[#allocation7 + $0x110] sm:$0xff] %v222
    %351 = vst [vmem:[#allocation7 + $0x118] sm:$0xff] %v223
    %352 = vst [vmem:[#allocation7 + $0x120] sm:$0xff] %v224
    %353 = vst [vmem:[#allocation7 + $0x128] sm:$0xff] %v225
    %354 = vst [vmem:[#allocation7 + $0x130] sm:$0xff] %v226
    %355 = vst [vmem:[#allocation7 + $0x138] sm:$0xff] %v227
    %356 = vst [vmem:[#allocation7 + $0x140] sm:$0xff] %v228
    %357 = vst [vmem:[#allocation7 + $0x148] sm:$0xff] %v229
    %358 = vst [vmem:[#allocation7 + $0x150] sm:$0xff] %v230
    %359 = vst [vmem:[#allocation7 + $0x158] sm:$0xff] %v231
    %360 = vst [vmem:[#allocation7 + $0x160] sm:$0xff] %v232
    %361 = vst [vmem:[#allocation7 + $0x168] sm:$0xff] %v233
    %362 = vst [vmem:[#allocation7 + $0x170] sm:$0xff] %v234
    %363 = vst [vmem:[#allocation7 + $0x178] sm:$0xff] %v235
    %364 = vst [vmem:[#allocation7 + $0x180] sm:$0xff] %v236
    %365 = vst [vmem:[#allocation7 + $0x188] sm:$0xff] %v237
    %366 = vst [vmem:[#allocation7 + $0x190] sm:$0xff] %v238
    %367 = vst [vmem:[#allocation7 + $0x198] sm:$0xff] %v239
    %368 = vst [vmem:[#allocation7 + $0x1a0] sm:$0xff] %v240
    %369 = vst [vmem:[#allocation7 + $0x1a8] sm:$0xff] %v241
    %370 = vst [vmem:[#allocation7 + $0x1b0] sm:$0xff] %v242
    %371 = vst [vmem:[#allocation7 + $0x1b8] sm:$0xff] %v243
    %372 = vst [vmem:[#allocation7 + $0x1c0] sm:$0xff] %v244
    %373 = vst [vmem:[#allocation7 + $0x1c8] sm:$0xff] %v245
    %374 = vst [vmem:[#allocation7 + $0x1d0] sm:$0xff] %v246
    %375 = vst [vmem:[#allocation7 + $0x1d8] sm:$0xff] %v247
    %376 = vst [vmem:[#allocation7 + $0x1e0] sm:$0xff] %v248
    %377 = vst [vmem:[#allocation7 + $0x1e8] sm:$0xff] %v249
    %378 = vst [vmem:[#allocation7 + $0x1f0] sm:$0xff] %v250
    %379 = vst [vmem:[#allocation7 + $0x1f8] sm:$0xff] %v251
    %380 = vst [vmem:[#allocation7 + $0x200] sm:$0xff] %v252
    %381 = vst [vmem:[#allocation7 + $0x208] sm:$0xff] %v253
    %382 = vst [vmem:[#allocation7 + $0x210] sm:$0xff] %v254
    %383 = vst [vmem:[#allocation7 + $0x218] sm:$0xff] %v255
    %384 = vst [vmem:[#allocation7 + $0x220] sm:$0xff] %v256
    %385 = vst [vmem:[#allocation7 + $0x228] sm:$0xff] %v257
    %386 = vst [vmem:[#allocation7 + $0x230] sm:$0xff] %v258
    %387 = vst [vmem:[#allocation7 + $0x238] sm:$0xff] %v259
    %388 = vst [vmem:[#allocation7 + $0x240] sm:$0xff] %v260
    %389 = vst [vmem:[#allocation7 + $0x248] sm:$0xff] %v261
    %390 = vst [vmem:[#allocation7 + $0x250] sm:$0xff] %v262
    %391 = vst [vmem:[#allocation7 + $0x258] sm:$0xff] %v263
    %392 = vst [vmem:[#allocation7 + $0x260] sm:$0xff] %v264
    %393 = vst [vmem:[#allocation7 + $0x268] sm:$0xff] %v265
    %394 = vst [vmem:[#allocation7 + $0x270] sm:$0xff] %v266
    %395 = vst [vmem:[#allocation7 + $0x278] sm:$0xff] %v267
    %396 = vst [vmem:[#allocation7 + $0x280] sm:$0xff] %v268
    %397 = vst [vmem:[#allocation7 + $0x288] sm:$0xff] %v269
    %398 = vst [vmem:[#allocation7 + $0x290] sm:$0xff] %v270
    %399 = vst [vmem:[#allocation7 + $0x298] sm:$0xff] %v271
    %400 = vst [vmem:[#allocation7 + $0x2a0] sm:$0xff] %v272
    %401 = vst [vmem:[#allocation7 + $0x2a8] sm:$0xff] %v273
    %402 = vst [vmem:[#allocation7 + $0x2b0] sm:$0xff] %v274
    %403 = vst [vmem:[#allocation7 + $0x2b8] sm:$0xff] %v275
    %404 = vst [vmem:[#allocation7 + $0x2c0] sm:$0xff] %v276
    %405 = vst [vmem:[#allocation7 + $0x2c8] sm:$0xff] %v277
    %406 = vst [vmem:[#allocation7 + $0x2d0] sm:$0xff] %v278
    %407 = vst [vmem:[#allocation7 + $0x2d8] sm:$0xff] %v279
    %408 = vst [vmem:[#allocation7 + $0x2e0] sm:$0xff] %v280
    %409 = vst [vmem:[#allocation7 + $0x2e8] sm:$0xff] %v281
    %410 = vst [vmem:[#allocation7 + $0x2f0] sm:$0xff] %v282
    %411 = vst [vmem:[#allocation7 + $0x2f8] sm:$0xff] %v283
    %412 = vst [vmem:[#allocation7 + $0x300] sm:$0xff] %v284
    %413 = vst [vmem:[#allocation7 + $0x308] sm:$0xff] %v285
    %414 = vst [vmem:[#allocation7 + $0x310] sm:$0xff] %v286
    %415 = vst [vmem:[#allocation7 + $0x318] sm:$0xff] %v287
    %416 = vst [vmem:[#allocation7 + $0x320] sm:$0xff] %v288
    %417 = vst [vmem:[#allocation7 + $0x328] sm:$0xff] %v289
    %418 = vst [vmem:[#allocation7 + $0x330] sm:$0xff] %v290
    %419 = vst [vmem:[#allocation7 + $0x338] sm:$0xff] %v291
    %420 = vst [vmem:[#allocation7 + $0x340] sm:$0xff] %v292
    %421 = vst [vmem:[#allocation7 + $0x348] sm:$0xff] %v293
    %422 = vst [vmem:[#allocation7 + $0x350] sm:$0xff] %v294
    %423 = vst [vmem:[#allocation7 + $0x358] sm:$0xff] %v295
    %424 = vst [vmem:[#allocation7 + $0x360] sm:$0xff] %v296
    %425 = vst [vmem:[#allocation7 + $0x368] sm:$0xff] %v297
    %426 = vst [vmem:[#allocation7 + $0x370] sm:$0xff] %v298
    %427 = vst [vmem:[#allocation7 + $0x378] sm:$0xff] %v299
    %428 = vst [vmem:[#allocation7 + $0x380] sm:$0xff] %v300
    %429 = vst [vmem:[#allocation7 + $0x388] sm:$0xff] %v301
    %430 = vst [vmem:[#allocation7 + $0x390] sm:$0xff] %v302
    %431 = vst [vmem:[#allocation7 + $0x398] sm:$0xff] %v303
    %432 = vst [vmem:[#allocation7 + $0x3a0] sm:$0xff] %v304
    %433 = vst [vmem:[#allocation7 + $0x3a8] sm:$0xff] %v305
    %434 = vst [vmem:[#allocation7 + $0x3b0] sm:$0xff] %v306
    %435 = vst [vmem:[#allocation7 + $0x3b8] sm:$0xff] %v307
    %436 = vst [vmem:[#allocation7 + $0x3c0] sm:$0xff] %v308
    %437 = vst [vmem:[#allocation7 + $0x3c8] sm:$0xff] %v309
    %438 = vst [vmem:[#allocation7 + $0x3d0] sm:$0xff] %v310
    %439 = vst [vmem:[#allocation7 + $0x3d8] sm:$0xff] %v311
    %440 = vst [vmem:[#allocation7 + $0x3e0] sm:$0xff] %v312
    %441 = vst [vmem:[#allocation7 + $0x3e8] sm:$0xff] %v313
    %442 = vst [vmem:[#allocation7 + $0x3f0] sm:$0xff] %v314
    %443 = vst [vmem:[#allocation7 + $0x3f8] sm:$0xff] %v315
    // Predicated region
    $region18: #{tpu_custom_call.1} parent=1 // pred_check
      _
    $region19: #{tpu_custom_call.1} parent=1 // pred_check_branch
      %445 = sbr.rel (0) target = $region21
    $region20: #{tpu_custom_call.1} parent=1 // pred_region
      %s447 = ssub.s32 16384, 16384
      %448 = vsyncadd [#allocation4], %s447
      %s449 = sshll.u32 [#allocation7], 4
      %s450 = int_to_ptr.vmem [resolvable:$true] %s449
      %455 = dma.vmem_to_hbm [thread:$0]  %s450, 16384, %s2, [#allocation4], 512, 512, 32
    $region21: #{tpu_custom_call.1} parent=1 // pred_fallthru
      _
    // Predicated region
    $region22: #{tpu_custom_call.1} parent=1 // pred_check
      _
    $region23: #{tpu_custom_call.1} parent=1 // pred_check_branch
      %457 = sbr.rel (0) target = $region25
    $region24: #{tpu_custom_call.1} parent=1 // pred_region
      %458 = dma.done [#allocation4], 16384
    $region25: #{tpu_custom_call.1} parent=1 // pred_fallthru
      _
    %459 = vsyncpa [#allocation3], 1
    %460 = vsyncpa [#allocation6], 1
    %461 = vsyncpa [#allocation4], 1

</llo_original>
